<compile_context>
chip_gen: v5e
topology: v5e:2x2
jax: 0.10.0
libtpu: 0.0.40
codegen_flags: <defaults>
</compile_context>

<pallas_src>
import jax
import jax.numpy as jnp
from jax.experimental import pallas as pl
from jax.experimental.pallas import tpu as pltpu


def _round_up(x, m):
    return ((x + m - 1) // m) * m


def _transpose_kernel(x_ref, o_ref):
    # x_ref: (T_HW, C) ; o_ref: (C, T_HW)   (batch dim squeezed away)
    # Minor-dim swap goes to the XLU; stores are lane-dense along T_HW.
    o_ref[...] = jnp.transpose(x_ref[...], (1, 0))


def _vmem_budget_bytes():
    """Target total (double-buffered, in + out) VMEM footprint per grid step."""
    try:
        phys = pltpu.get_tpu_info().vmem_capacity_bytes
    except Exception:
        phys = 64 << 20  # assume the tightest generation (v7x: 64 MiB per TC)
    # v5e/v6e (128 MiB) -> 24 MiB budget; v7x (64 MiB) -> 16 MiB budget.
    return min(24 << 20, max(8 << 20, phys // 4))


def _pick_hw_tile(n, hw, c, itemsize):
    """Pick an HW tile (multiple of 128) from the *padded* VMEM footprint."""
    if hw <= 256:
        # Single full-extent block per image; full dims always satisfy (8,128).
        return hw

    # Padded per-block footprint per unit of T_HW:
    #   input  (t, C): lane dim C padded to 128      -> round_up(C, 128) elems
    #   output (C, t): sublane dim C packed/padded   -> round_up(C, subl) elems
    sublane = max(8, 32 // max(1, itemsize))          # f32:8, bf16:16, int8:32
    per_hw_elems = _round_up(c, 128) + _round_up(c, sublane)
    per_hw_bytes = 2 * per_hw_elems * itemsize        # x2 for double buffering

    max_t = _vmem_budget_bytes() // per_hw_bytes
    t = min((hw // 128) * 128,                        # never exceed the array
            (max_t // 128) * 128,                     # padded-VMEM budget
            16384)                                    # DMA-size sweet spot

    # v7x megacore: keep at least ~4 parallel grid steps when N is small.
    want_hw_tiles = -(-4 // max(1, n))                # ceil(4 / n)
    if want_hw_tiles > 1 and hw // want_hw_tiles >= 128:
        t = min(t, ((hw // want_hw_tiles) // 128) * 128)

    return max(t, 128)


def nhwc_to_nchw(x):
    """x.permute(0, 3, 1, 2): (N, H, W, C) -> (N, C, H, W)."""
    N, H, W, C = x.shape
    HW = H * W
    itemsize = jnp.dtype(x.dtype).itemsize

    # Tiny inputs: launch + per-step pipeline overhead dominates; XLA's fused
    # transpose is as fast or faster, so skip the custom-call boundary.
    if HW < 128 or x.size * itemsize < (256 << 10):
        return jnp.transpose(x, (0, 3, 1, 2))

    # Free layout plumbing: NHWC is contiguous in (H*W, C).
    x2 = x.reshape(N, HW, C)

    t_hw = _pick_hw_tile(N, HW, C, itemsize)
    grid = (N, pl.cdiv(HW, t_hw))

    # Actual padded, double-buffered in+out footprint for the chosen tile.
    sublane = max(8, 32 // max(1, itemsize))
    footprint = 2 * t_hw * (_round_up(C, 128) + _round_up(C, sublane)) * itemsize
    vmem_limit = min(40 << 20, max(16 << 20, footprint + (8 << 20)))

    out2 = pl.pallas_call(
        _transpose_kernel,
        out_shape=jax.ShapeDtypeStruct((N, C, HW), x.dtype),
        grid_spec=pltpu.PrefetchScalarGridSpec(
            num_scalar_prefetch=0,
            grid=grid,
            in_specs=[pl.BlockSpec((pl.Squeezed(), t_hw, C),
                                   lambda n, j: (n, j, 0))],
            out_specs=pl.BlockSpec((pl.Squeezed(), C, t_hw),
                                   lambda n, j: (n, 0, j)),
        ),
        compiler_params=pltpu.CompilerParams(
            # Pure relayout: every grid step is independent.
            dimension_semantics=("parallel", "parallel"),
            vmem_limit_bytes=vmem_limit,
        ),
    )(x2)

    # (N, C, H*W) -> (N, C, H, W): contiguous reshape, no data movement.
    return out2.reshape(N, C, H, W)


if __name__ == "__main__":
    key = jax.random.PRNGKey(0)

    # Spec-consistent small shape (takes the tiny-input fast path).
    x_small = jax.random.normal(key, (2, 16, 16, 4), dtype=jnp.float32)
    out_small = jax.block_until_ready(nhwc_to_nchw(x_small))
    ref_small = jnp.transpose(x_small, (0, 3, 1, 2))
    assert out_small.shape == (2, 4, 16, 16), out_small.shape
    assert out_small.dtype == x_small.dtype
    assert jnp.array_equal(out_small, ref_small), "mismatch (fast path)"

    # Shapes that exercise the Pallas kernel:
    #   (2, 56, 56, 40): H*W = 3136 (not a multiple of 128) -> cdiv-masked tail
    #   (1, 64, 64, 32): aligned H*W, small N -> megacore step-count cap
    for shape in [(2, 56, 56, 40), (1, 64, 64, 32)]:
        key, sub = jax.random.split(key)
        x = jax.random.normal(sub, shape, dtype=jnp.float32)
        out = jax.block_until_ready(nhwc_to_nchw(x))
        ref = jnp.transpose(x, (0, 3, 1, 2))
        assert out.shape == ref.shape, (out.shape, ref.shape)
        assert out.dtype == x.dtype
        assert jnp.array_equal(out, ref), f"mismatch vs reference for {shape}"

    print("KERNEL_OK")
</pallas_src>

<mosaic_0001>
module attributes {stable_mosaic.version = 11 : i64} {
  func.func @_transpose_kernel(%arg0: i32, %arg1: i32, %arg2: memref<1x1536x40xf32, #tpu.memory_space<vmem>>, %arg3: memref<1x40x1536xf32, #tpu.memory_space<vmem>>) attributes {dimension_semantics = [#tpu.dimension_semantics<parallel>, #tpu.dimension_semantics<parallel>], iteration_bounds = array<i64: 2, 3>, scalar_prefetch = 0 : i64, scratch_operands = 0 : i64, tpu.core_type = #tpu.core_type<tc>, window_params = [{transform_indices = @transform_0, window_bounds = array<i64: 1, 1536, 40>}, {transform_indices = @transform_1, window_bounds = array<i64: 1, 40, 1536>}]} {
    %c0 = arith.constant 0 : index
    %c0_0 = arith.constant 0 : index
    %c0_1 = arith.constant 0 : index
    %0 = vector.load %arg2[%c0, %c0_0, %c0_1] : memref<1x1536x40xf32, #tpu.memory_space<vmem>>, vector<1x1536x40xf32>
    %1 = vector.shape_cast %0 : vector<1x1536x40xf32> to vector<1536x40xf32>
    %2 = tpu.transpose %1, [1, 0] : vector<1536x40xf32> -> vector<40x1536xf32>
    %c0_2 = arith.constant 0 : index
    %c0_3 = arith.constant 0 : index
    %c0_4 = arith.constant 0 : index
    %3 = vector.load %arg3[%c0_2, %c0_3, %c0_4] : memref<1x40x1536xf32, #tpu.memory_space<vmem>>, vector<1x40x1536xf32>
    %4 = vector.shape_cast %3 : vector<1x40x1536xf32> to vector<40x1536xf32>
    %5 = vector.shape_cast %2 : vector<40x1536xf32> to vector<1x40x1536xf32>
    tpu.vector_store %arg3[%c0_2, %c0_3, %c0_4], %5 {strides = array<i32>} : memref<1x40x1536xf32, #tpu.memory_space<vmem>>, vector<1x40x1536xf32>,
    return
  }
  func.func @transform_0(%arg0: i32, %arg1: i32) -> (i32, i32, i32) {
    %c0_i32 = arith.constant 0 : i32
    %c0_i32_0 = arith.constant 0 : i32
    return %arg0, %arg1, %c0_i32 : i32, i32, i32
  }
  func.func @transform_1(%arg0: i32, %arg1: i32) -> (i32, i32, i32) {
    %c0_i32 = arith.constant 0 : i32
    %c0_i32_0 = arith.constant 0 : i32
    return %arg0, %c0_i32, %arg1 : i32, i32, i32
  }
}

</mosaic_0001>

<llo_original>
// kernel: tpu_custom_call.1
$region0: #{tpu_custom_call.1}
  #allocation0 [shape = 'u32[]', space=smem, size = 0x4, offset = 0x4, fixed_abs, tag = 'smem constant byte address 0x4 - core index']
  #allocation1 [shape = 'u32[72,128]{1,0:T(1,128)}', space=vmem, size = 0x9000, scoped, tag = 'internal scratch']
  %s0 = inlined_call_operand.vmem [shape: f32[2,3136,40], index: 0, kind: input, shape index: {}]
  %s1 = inlined_call_operand.hbm [shape: f32[2,40,3136], index: 1, kind: output, shape index: {}]
  %s2 = sld [smem:[#allocation0]]
  $region37: #{tpu_custom_call.1} parent=0
    _
  %s4 = ssub.s32 1, %s2
  %s5 = scalar_select 0, %s4, %s2
  $region1: #{tpu_custom_call.1} parent=0
    #allocation2 [shape = 'u8[491520]{0}', space=vmem, size = 0x78000, scoped, tag = 'output window, operand 0']
    #allocation3 [shape = 's32[2]{0}', space=sflag, size = 0x8, scoped, tag = 'scoped memory for tpu_custom_call.1']
    %6 = vsyncpa [#allocation3], 0
    %s7 = scalar_lea.sflag [#allocation3], 1
    %8 = vsyncpa %s7, 0
    loop: start=0, step=1, limit=8
    $region2: #{tpu_custom_call.1} parent=1 // loop_pre_header
      _
    $region3: #{tpu_custom_call.1} parent=1 // loop_header
      %s10 = sphi 0, %s14
      %p11 = scmp.ge.s32.totalorder %s10, 8
      %s17 = sphi 0, %s29
      %s18 = sphi 0, %s25
      %s19 = sphi 0, %s17
      %s20 = sphi 0, %s18
      %s21 = sphi 0, %s19
      %s22 = sphi 0, %s20
      %s34 = sphi 0, %s36
      %s37 = sphi 0, %s34
      %s38 = sphi 0, %s37
      %s54 = sphi 0, %s38
      %s62 = sphi 0, %s64
      %s65 = sphi 0, %s62
      %s66 = sphi 0, %s65
      %s82 = sphi 0, %s66
    $region4: #{tpu_custom_call.1} parent=1 // loop_header_branch
      %13 = sbr.rel (%p11) target = $region8
    $region5: #{tpu_custom_call.1} parent=1 // loop_body
      %s15 = ssub.s32 %s10, 1
      %s16 = ssub.s32 %s10, 2
      %s23 = sadd.s32 1, %s18
      %p24 = scmp.ge.s32.totalorder %s23, 3
      %s25 = scalar_select %p24, 0, %s23
      %s26 = sadd.s32 1, %s17
      %s27 = scalar_select %p24, %s26, %s17
      %p28 = scmp.ge.s32.totalorder %s27, 2
      %s29 = scalar_select %p28, 0, %s27
      %s30 = ssub.s32 %s17, %s29
      %s31 = ssub.s32 %s18, %s25
      %s32 = sor.u32 %s30, %s31
      %p33 = scmp.eq.s32.totalorder %s32, 0
      %s35 = sadd.s32 %s34, 1
      %s36 = scalar_select %p33, %s34, %s35
      %p39 = pneg %p33
      %p40 = scmp.eq.s32.totalorder %s10, 5
      %p41 = por %p39, %p40
      %p42 = scmp.ne.s32.totalorder %s34, %s37
      %p43 = scmp.eq.s32.totalorder %s10, 0
      %p44 = por %p42, %p43
      %p45 = scmp.ne.s32.totalorder %s34, %s37
      %p46 = scmp.eq.s32.totalorder %s15, 5
      %p47 = por %p45, %p46
      %p48 = scmp.ne.s32.totalorder %s37, %s38
      %p49 = scmp.eq.s32.totalorder %s15, 0
      %p50 = por %p48, %p49
      %p51 = scmp.ne.s32.totalorder %s37, %s38
      %p52 = scmp.eq.s32.totalorder %s16, 5
      %p53 = por %p51, %p52
      %p55 = scmp.ne.s32.totalorder %s38, %s54
      %p56 = scmp.eq.s32.totalorder %s16, 0
      %p57 = por %p55, %p56
      %s58 = ssub.s32 %s17, %s29
      %s59 = ssub.s32 %s18, %s25
      %s60 = sor.u32 %s58, %s59
      %p61 = scmp.eq.s32.totalorder %s60, 0
      %s63 = sadd.s32 %s62, 1
      %s64 = scalar_select %p61, %s62, %s63
      %p67 = pneg %p61
      %p68 = scmp.eq.s32.totalorder %s10, 5
      %p69 = por %p67, %p68
      %p70 = scmp.ne.s32.totalorder %s62, %s65
      %p71 = scmp.eq.s32.totalorder %s10, 0
      %p72 = por %p70, %p71
      %p73 = scmp.ne.s32.totalorder %s62, %s65
      %p74 = scmp.eq.s32.totalorder %s15, 5
      %p75 = por %p73, %p74
      %p76 = scmp.ne.s32.totalorder %s65, %s66
      %p77 = scmp.eq.s32.totalorder %s15, 0
      %p78 = por %p76, %p77
      %p79 = scmp.ne.s32.totalorder %s65, %s66
      %p80 = scmp.eq.s32.totalorder %s16, 5
      %p81 = por %p79, %p80
      %p83 = scmp.ne.s32.totalorder %s66, %s82
      %p84 = scmp.eq.s32.totalorder %s16, 0
      %p85 = por %p83, %p84
      %p86 = scmp.le.s32.totalorder 1, %s10
      %p87 = scmp.lt.s32.totalorder %s10, 7
      %p88 = pnand %p86, %p87
      %p89 = pneg %p88
      // Predicated region
      $region9: #{tpu_custom_call.1} parent=5 // pred_check
        _
      $region10: #{tpu_custom_call.1} parent=5 // pred_check_branch
        %91 = sbr.rel (%p88) target = $region12
      $region11: #{tpu_custom_call.1} parent=5 // pred_region
        %s92 = ssub.s32 %s10, 1
      $region12: #{tpu_custom_call.1} parent=5 // pred_fallthru
        _
      %p93 = scmp.lt.s32.totalorder %s10, 6
      // Predicated region
      $region13: #{tpu_custom_call.1} parent=5 // pred_check
        %p94 = pneg %p93
      $region14: #{tpu_custom_call.1} parent=5 // pred_check_branch
        %96 = sbr.rel (%p94) target = $region16
      $region15: #{tpu_custom_call.1} parent=5 // pred_region
        // Predicated region
        $region17: #{tpu_custom_call.1} parent=15 // pred_check
          %p97 = pneg %p44
        $region18: #{tpu_custom_call.1} parent=15 // pred_check_branch
          %99 = sbr.rel (%p97) target = $region20
        $region19: #{tpu_custom_call.1} parent=15 // pred_region
          %s100 = smul.u32 192, %s18
          %s101 = ssub.s32 392, %s100
          %p102 = scmp.lt.s32.totalorder %s101, 192
          %s103 = scalar_select %p102, %s101, 192
          %s104 = smul.u32 8, %s103
          %p105 = scmp.lt.s32.totalorder %s17, 1
          %s106 = scalar_select %p105, %s17, 1
          %p107 = scmp.lt.s32.totalorder %s100, 391
          %s108 = scalar_select %p107, %s100, 391
          %s109 = smul.addr %s106, 392
          %s110 = sadd.s32 %s108, %s109
          %s111 = smul.addr %s110, 8
          %s112 = scalar_lea.vmem %s0, %s111
          %s113 = smul.u32 192, %s18
          %s114 = ssub.s32 392, %s113
          %p115 = scmp.lt.s32.totalorder %s114, 192
          %s116 = scalar_select %p115, %s114, 192
          %s117 = smul.u32 8, %s116
        $region20: #{tpu_custom_call.1} parent=15 // pred_fallthru
          _
      $region16: #{tpu_custom_call.1} parent=5 // pred_fallthru
        _
      %p118 = scmp.le.s32.totalorder 1, %s10
      %p119 = scmp.lt.s32.totalorder %s10, 7
      %p120 = pnand %p118, %p119
      %p121 = pneg %p120
      // Predicated region
      $region21: #{tpu_custom_call.1} parent=5 // pred_check
        _
      $region22: #{tpu_custom_call.1} parent=5 // pred_check_branch
        %123 = sbr.rel (%p120) target = $region24
      $region23: #{tpu_custom_call.1} parent=5 // pred_region
        %s124 = ssub.s32 %s10, 1
        %s125 = smul.u32 192, %s20
        %s126 = ssub.s32 392, %s125
        %p127 = scmp.lt.s32.totalorder %s126, 192
        %s128 = scalar_select %p127, %s126, 192
        %s129 = smul.u32 8, %s128
        %p130 = scmp.lt.s32.totalorder %s19, 1
        %s131 = scalar_select %p130, %s19, 1
        %p132 = scmp.lt.s32.totalorder %s125, 391
        %s133 = scalar_select %p132, %s125, 391
        %s134 = smul.addr %s131, 392
        %s135 = sadd.s32 %s133, %s134
        %s136 = smul.addr %s135, 8
        %s137 = scalar_lea.vmem %s0, %s136
        %p138 = pneg %p50
        %p139 = pneg %p47
        %p140 = pneg %p78
        %p141 = pneg %p75
        %s142 = sand.u32 %s65, 1
        %s143 = scalar_lea.sflag [#allocation3], %s142
        %s144 = sand.u32 %s65, 1
        %s145 = smul.addr %s144, 480
        %s146 = scalar_lea.vmem [#allocation2], %s145
        %s147 = smul.u32 192, %s20
        %s148 = ssub.s32 392, %s147
        %p149 = scmp.lt.s32.totalorder %s148, 192
        %s150 = scalar_select %p149, %s148, 192
        %s151 = smul.u32 8, %s150
        %p152 = scmp.lt.s32.totalorder %s19, 1
        %s153 = scalar_select %p152, %s19, 1
        %p154 = scmp.lt.s32.totalorder %s147, 391
        %s155 = scalar_select %p154, %s147, 391
        %s156 = smul.addr %s153, 392
        %s157 = sadd.s32 %s155, %s156
        %s158 = smul.addr %s157, 8
        %s159 = scalar_lea.vmem %s0, %s158
        %s160 = smul.u32 192, %s20
        %s161 = ssub.s32 392, %s160
        %p162 = scmp.lt.s32.totalorder %s161, 192
        %s163 = scalar_select %p162, %s161, 192
        %s164 = smul.u32 8, %s163
        %s165 = smul.u32 12, %s20
        %s166 = ssub.s32 25, %s165
        %p167 = scmp.lt.s32.totalorder %s166, 12
        %s168 = scalar_select %p167, %s166, 12
        %s169 = smul.u32 40, %s168
        %v170 = vld [vmem:[%s159] sm:$0xff]
        %v171 = vld [vmem:[%s159 + $0x8] sm:$0xff]
        %v172 = vld [vmem:[%s159 + $0x10] sm:$0xff]
        %v173 = vld [vmem:[%s159 + $0x18] sm:$0xff]
        %v174 = vld [vmem:[%s159 + $0x20] sm:$0xff]
        %v175 = vld [vmem:[%s159 + $0x28] sm:$0xff]
        %v176 = vld [vmem:[%s159 + $0x30] sm:$0xff]
        %v177 = vld [vmem:[%s159 + $0x38] sm:$0xff]
        %v178 = vld [vmem:[%s159 + $0x40] sm:$0xff]
        %v179 = vld [vmem:[%s159 + $0x48] sm:$0xff]
        %v180 = vld [vmem:[%s159 + $0x50] sm:$0xff]
        %v181 = vld [vmem:[%s159 + $0x58] sm:$0xff]
        %v182 = vld [vmem:[%s159 + $0x60] sm:$0xff]
        %v183 = vld [vmem:[%s159 + $0x68] sm:$0xff]
        %v184 = vld [vmem:[%s159 + $0x70] sm:$0xff]
        %v185 = vld [vmem:[%s159 + $0x78] sm:$0xff]
        %v186 = vld [vmem:[%s159 + $0x80] sm:$0xff]
        %v187 = vld [vmem:[%s159 + $0x88] sm:$0xff]
        %v188 = vld [vmem:[%s159 + $0x90] sm:$0xff]
        %v189 = vld [vmem:[%s159 + $0x98] sm:$0xff]
        %v190 = vld [vmem:[%s159 + $0xa0] sm:$0xff]
        %v191 = vld [vmem:[%s159 + $0xa8] sm:$0xff]
        %v192 = vld [vmem:[%s159 + $0xb0] sm:$0xff]
        %v193 = vld [vmem:[%s159 + $0xb8] sm:$0xff]
        %v194 = vld [vmem:[%s159 + $0xc0] sm:$0xff]
        %v195 = vld [vmem:[%s159 + $0xc8] sm:$0xff]
        %v196 = vld [vmem:[%s159 + $0xd0] sm:$0xff]
        %v197 = vld [vmem:[%s159 + $0xd8] sm:$0xff]
        %v198 = vld [vmem:[%s159 + $0xe0] sm:$0xff]
        %v199 = vld [vmem:[%s159 + $0xe8] sm:$0xff]
        %v200 = vld [vmem:[%s159 + $0xf0] sm:$0xff]
        %v201 = vld [vmem:[%s159 + $0xf8] sm:$0xff]
        %v202 = vld [vmem:[%s159 + $0x100] sm:$0xff]
        %v203 = vld [vmem:[%s159 + $0x108] sm:$0xff]
        %v204 = vld [vmem:[%s159 + $0x110] sm:$0xff]
        %v205 = vld [vmem:[%s159 + $0x118] sm:$0xff]
        %v206 = vld [vmem:[%s159 + $0x120] sm:$0xff]
        %v207 = vld [vmem:[%s159 + $0x128] sm:$0xff]
        %v208 = vld [vmem:[%s159 + $0x130] sm:$0xff]
        %v209 = vld [vmem:[%s159 + $0x138] sm:$0xff]
        %v210 = vld [vmem:[%s159 + $0x140] sm:$0xff]
        %v211 = vld [vmem:[%s159 + $0x148] sm:$0xff]
        %v212 = vld [vmem:[%s159 + $0x150] sm:$0xff]
        %v213 = vld [vmem:[%s159 + $0x158] sm:$0xff]
        %v214 = vld [vmem:[%s159 + $0x160] sm:$0xff]
        %v215 = vld [vmem:[%s159 + $0x168] sm:$0xff]
        %v216 = vld [vmem:[%s159 + $0x170] sm:$0xff]
        %v217 = vld [vmem:[%s159 + $0x178] sm:$0xff]
        %v218 = vld [vmem:[%s159 + $0x180] sm:$0xff]
        %v219 = vld [vmem:[%s159 + $0x188] sm:$0xff]
        %v220 = vld [vmem:[%s159 + $0x190] sm:$0xff]
        %v221 = vld [vmem:[%s159 + $0x198] sm:$0xff]
        %v222 = vld [vmem:[%s159 + $0x1a0] sm:$0xff]
        %v223 = vld [vmem:[%s159 + $0x1a8] sm:$0xff]
        %v224 = vld [vmem:[%s159 + $0x1b0] sm:$0xff]
        %v225 = vld [vmem:[%s159 + $0x1b8] sm:$0xff]
        %v226 = vld [vmem:[%s159 + $0x1c0] sm:$0xff]
        %v227 = vld [vmem:[%s159 + $0x1c8] sm:$0xff]
        %v228 = vld [vmem:[%s159 + $0x1d0] sm:$0xff]
        %v229 = vld [vmem:[%s159 + $0x1d8] sm:$0xff]
        %v230 = vld [vmem:[%s159 + $0x1e0] sm:$0xff]
        %v231 = vld [vmem:[%s159 + $0x1e8] sm:$0xff]
        %v232 = vld [vmem:[%s159 + $0x1f0] sm:$0xff]
        %v233 = vld [vmem:[%s159 + $0x1f8] sm:$0xff]
        %v234 = vld [vmem:[%s159 + $0x200] sm:$0xff]
        %v235 = vld [vmem:[%s159 + $0x208] sm:$0xff]
        %v236 = vld [vmem:[%s159 + $0x210] sm:$0xff]
        %v237 = vld [vmem:[%s159 + $0x218] sm:$0xff]
        %v238 = vld [vmem:[%s159 + $0x220] sm:$0xff]
        %v239 = vld [vmem:[%s159 + $0x228] sm:$0xff]
        %v240 = vld [vmem:[%s159 + $0x230] sm:$0xff]
        %v241 = vld [vmem:[%s159 + $0x238] sm:$0xff]
        %v242 = vld [vmem:[%s159 + $0x240] sm:$0xff]
        %v243 = vld [vmem:[%s159 + $0x248] sm:$0xff]
        %v244 = vld [vmem:[%s159 + $0x250] sm:$0xff]
        %v245 = vld [vmem:[%s159 + $0x258] sm:$0xff]
        %v246 = vld [vmem:[%s159 + $0x260] sm:$0xff]
        %v247 = vld [vmem:[%s159 + $0x268] sm:$0xff]
        %v248 = vld [vmem:[%s159 + $0x270] sm:$0xff]
        %v249 = vld [vmem:[%s159 + $0x278] sm:$0xff]
        %v250 = vld [vmem:[%s159 + $0x280] sm:$0xff]
        %v251 = vld [vmem:[%s159 + $0x288] sm:$0xff]
        %v252 = vld [vmem:[%s159 + $0x290] sm:$0xff]
        %v253 = vld [vmem:[%s159 + $0x298] sm:$0xff]
        %v254 = vld [vmem:[%s159 + $0x2a0] sm:$0xff]
        %v255 = vld [vmem:[%s159 + $0x2a8] sm:$0xff]
        %v256 = vld [vmem:[%s159 + $0x2b0] sm:$0xff]
        %v257 = vld [vmem:[%s159 + $0x2b8] sm:$0xff]
        %v258 = vld [vmem:[%s159 + $0x2c0] sm:$0xff]
        %v259 = vld [vmem:[%s159 + $0x2c8] sm:$0xff]
        %v260 = vld [vmem:[%s159 + $0x2d0] sm:$0xff]
        %v261 = vld [vmem:[%s159 + $0x2d8] sm:$0xff]
        %v262 = vld [vmem:[%s159 + $0x2e0] sm:$0xff]
        %v263 = vld [vmem:[%s159 + $0x2e8] sm:$0xff]
        %v264 = vld [vmem:[%s159 + $0x2f0] sm:$0xff]
        %v265 = vld [vmem:[%s159 + $0x2f8] sm:$0xff]
        %v266 = vld [vmem:[%s159 + $0x300] sm:$0xff]
        %v267 = vld [vmem:[%s159 + $0x308] sm:$0xff]
        %v268 = vld [vmem:[%s159 + $0x310] sm:$0xff]
        %v269 = vld [vmem:[%s159 + $0x318] sm:$0xff]
        %v270 = vld [vmem:[%s159 + $0x320] sm:$0xff]
        %v271 = vld [vmem:[%s159 + $0x328] sm:$0xff]
        %v272 = vld [vmem:[%s159 + $0x330] sm:$0xff]
        %v273 = vld [vmem:[%s159 + $0x338] sm:$0xff]
        %v274 = vld [vmem:[%s159 + $0x340] sm:$0xff]
        %v275 = vld [vmem:[%s159 + $0x348] sm:$0xff]
        %v276 = vld [vmem:[%s159 + $0x350] sm:$0xff]
        %v277 = vld [vmem:[%s159 + $0x358] sm:$0xff]
        %v278 = vld [vmem:[%s159 + $0x360] sm:$0xff]
        %v279 = vld [vmem:[%s159 + $0x368] sm:$0xff]
        %v280 = vld [vmem:[%s159 + $0x370] sm:$0xff]
        %v281 = vld [vmem:[%s159 + $0x378] sm:$0xff]
        %v282 = vld [vmem:[%s159 + $0x380] sm:$0xff]
        %v283 = vld [vmem:[%s159 + $0x388] sm:$0xff]
        %v284 = vld [vmem:[%s159 + $0x390] sm:$0xff]
        %v285 = vld [vmem:[%s159 + $0x398] sm:$0xff]
        %v286 = vld [vmem:[%s159 + $0x3a0] sm:$0xff]
        %v287 = vld [vmem:[%s159 + $0x3a8] sm:$0xff]
        %v288 = vld [vmem:[%s159 + $0x3b0] sm:$0xff]
        %v289 = vld [vmem:[%s159 + $0x3b8] sm:$0xff]
        %v290 = vld [vmem:[%s159 + $0x3c0] sm:$0xff]
        %v291 = vld [vmem:[%s159 + $0x3c8] sm:$0xff]
        %v292 = vld [vmem:[%s159 + $0x3d0] sm:$0xff]
        %v293 = vld [vmem:[%s159 + $0x3d8] sm:$0xff]
        %v294 = vld [vmem:[%s159 + $0x3e0] sm:$0xff]
        %v295 = vld [vmem:[%s159 + $0x3e8] sm:$0xff]
        %v296 = vld [vmem:[%s159 + $0x3f0] sm:$0xff]
        %v297 = vld [vmem:[%s159 + $0x3f8] sm:$0xff]
        %v298 = vld [vmem:[%s159 + $0x400] sm:$0xff]
        %v299 = vld [vmem:[%s159 + $0x408] sm:$0xff]
        %v300 = vld [vmem:[%s159 + $0x410] sm:$0xff]
        %v301 = vld [vmem:[%s159 + $0x418] sm:$0xff]
        %v302 = vld [vmem:[%s159 + $0x420] sm:$0xff]
        %v303 = vld [vmem:[%s159 + $0x428] sm:$0xff]
        %v304 = vld [vmem:[%s159 + $0x430] sm:$0xff]
        %v305 = vld [vmem:[%s159 + $0x438] sm:$0xff]
        %v306 = vld [vmem:[%s159 + $0x440] sm:$0xff]
        %v307 = vld [vmem:[%s159 + $0x448] sm:$0xff]
        %v308 = vld [vmem:[%s159 + $0x450] sm:$0xff]
        %v309 = vld [vmem:[%s159 + $0x458] sm:$0xff]
        %v310 = vld [vmem:[%s159 + $0x460] sm:$0xff]
        %v311 = vld [vmem:[%s159 + $0x468] sm:$0xff]
        %v312 = vld [vmem:[%s159 + $0x470] sm:$0xff]
        %v313 = vld [vmem:[%s159 + $0x478] sm:$0xff]
        %v314 = vld [vmem:[%s159 + $0x480] sm:$0xff]
        %v315 = vld [vmem:[%s159 + $0x488] sm:$0xff]
        %v316 = vld [vmem:[%s159 + $0x490] sm:$0xff]
        %v317 = vld [vmem:[%s159 + $0x498] sm:$0xff]
        %v318 = vld [vmem:[%s159 + $0x4a0] sm:$0xff]
        %v319 = vld [vmem:[%s159 + $0x4a8] sm:$0xff]
        %v320 = vld [vmem:[%s159 + $0x4b0] sm:$0xff]
        %v321 = vld [vmem:[%s159 + $0x4b8] sm:$0xff]
        %v322 = vld [vmem:[%s159 + $0x4c0] sm:$0xff]
        %v323 = vld [vmem:[%s159 + $0x4c8] sm:$0xff]
        %v324 = vld [vmem:[%s159 + $0x4d0] sm:$0xff]
        %v325 = vld [vmem:[%s159 + $0x4d8] sm:$0xff]
        %v326 = vld [vmem:[%s159 + $0x4e0] sm:$0xff]
        %v327 = vld [vmem:[%s159 + $0x4e8] sm:$0xff]
        %v328 = vld [vmem:[%s159 + $0x4f0] sm:$0xff]
        %v329 = vld [vmem:[%s159 + $0x4f8] sm:$0xff]
        %v330 = vld [vmem:[%s159 + $0x500] sm:$0xff]
        %v331 = vld [vmem:[%s159 + $0x508] sm:$0xff]
        %v332 = vld [vmem:[%s159 + $0x510] sm:$0xff]
        %v333 = vld [vmem:[%s159 + $0x518] sm:$0xff]
        %v334 = vld [vmem:[%s159 + $0x520] sm:$0xff]
        %v335 = vld [vmem:[%s159 + $0x528] sm:$0xff]
        %v336 = vld [vmem:[%s159 + $0x530] sm:$0xff]
        %v337 = vld [vmem:[%s159 + $0x538] sm:$0xff]
        %v338 = vld [vmem:[%s159 + $0x540] sm:$0xff]
        %v339 = vld [vmem:[%s159 + $0x548] sm:$0xff]
        %v340 = vld [vmem:[%s159 + $0x550] sm:$0xff]
        %v341 = vld [vmem:[%s159 + $0x558] sm:$0xff]
        %v342 = vld [vmem:[%s159 + $0x560] sm:$0xff]
        %v343 = vld [vmem:[%s159 + $0x568] sm:$0xff]
        %v344 = vld [vmem:[%s159 + $0x570] sm:$0xff]
        %v345 = vld [vmem:[%s159 + $0x578] sm:$0xff]
        %v346 = vld [vmem:[%s159 + $0x580] sm:$0xff]
        %v347 = vld [vmem:[%s159 + $0x588] sm:$0xff]
        %v348 = vld [vmem:[%s159 + $0x590] sm:$0xff]
        %v349 = vld [vmem:[%s159 + $0x598] sm:$0xff]
        %v350 = vld [vmem:[%s159 + $0x5a0] sm:$0xff]
        %v351 = vld [vmem:[%s159 + $0x5a8] sm:$0xff]
        %v352 = vld [vmem:[%s159 + $0x5b0] sm:$0xff]
        %v353 = vld [vmem:[%s159 + $0x5b8] sm:$0xff]
        %v354 = vld [vmem:[%s159 + $0x5c0] sm:$0xff]
        %v355 = vld [vmem:[%s159 + $0x5c8] sm:$0xff]
        %v356 = vld [vmem:[%s159 + $0x5d0] sm:$0xff]
        %v357 = vld [vmem:[%s159 + $0x5d8] sm:$0xff]
        %v358 = vld [vmem:[%s159 + $0x5e0] sm:$0xff]
        %v359 = vld [vmem:[%s159 + $0x5e8] sm:$0xff]
        %v360 = vld [vmem:[%s159 + $0x5f0] sm:$0xff]
        %v361 = vld [vmem:[%s159 + $0x5f8] sm:$0xff]
        %362 = vxpose.xlu0.b32.start [1/16] %v170, 128
        %363 = vxpose.xlu0.b32.cont [2/16] %v171, 128
        %364 = vxpose.xlu0.b32.cont [3/16] %v172, 128
        %365 = vxpose.xlu0.b32.cont [4/16] %v173, 128
        %366 = vxpose.xlu0.b32.cont [5/16] %v174, 128
        %367 = vxpose.xlu0.b32.cont [6/16] %v175, 128
        %368 = vxpose.xlu0.b32.cont [7/16] %v176, 128
        %369 = vxpose.xlu0.b32.cont [8/16] %v177, 128
        %370 = vxpose.xlu0.b32.cont [9/16] %v178, 128
        %371 = vxpose.xlu0.b32.cont [10/16] %v179, 128
        %372 = vxpose.xlu0.b32.cont [11/16] %v180, 128
        %373 = vxpose.xlu0.b32.cont [12/16] %v181, 128
        %374 = vxpose.xlu0.b32.cont [13/16] %v182, 128
        %375 = vxpose.xlu0.b32.cont [14/16] %v183, 128
        %376 = vxpose.xlu0.b32.cont [15/16] %v184, 128
        %377 = vxpose.xlu0.b32.end [16/16] %v185, 128
        %v378 = vpop.trf.xlu0
        %v379 = vpop.trf.xlu0
        %v380 = vpop.trf.xlu0
        %v381 = vpop.trf.xlu0
        %v382 = vpop.trf.xlu0
        %v383 = vpop.trf.xlu0
        %v384 = vpop.trf.xlu0
        %v385 = vpop.trf.xlu0
        %v386 = vpop.trf.xlu0
        %v387 = vpop.trf.xlu0
        %v388 = vpop.trf.xlu0
        %v389 = vpop.trf.xlu0
        %v390 = vpop.trf.xlu0
        %v391 = vpop.trf.xlu0
        %v392 = vpop.trf.xlu0
        %v393 = vpop.trf.xlu0
        %394 = vxpose.xlu0.b32.start [1/16] %v186, 128
        %395 = vxpose.xlu0.b32.cont [2/16] %v187, 128
        %396 = vxpose.xlu0.b32.cont [3/16] %v188, 128
        %397 = vxpose.xlu0.b32.cont [4/16] %v189, 128
        %398 = vxpose.xlu0.b32.cont [5/16] %v190, 128
        %399 = vxpose.xlu0.b32.cont [6/16] %v191, 128
        %400 = vxpose.xlu0.b32.cont [7/16] %v192, 128
        %401 = vxpose.xlu0.b32.cont [8/16] %v193, 128
        %402 = vxpose.xlu0.b32.cont [9/16] %v194, 128
        %403 = vxpose.xlu0.b32.cont [10/16] %v195, 128
        %404 = vxpose.xlu0.b32.cont [11/16] %v196, 128
        %405 = vxpose.xlu0.b32.cont [12/16] %v197, 128
        %406 = vxpose.xlu0.b32.cont [13/16] %v198, 128
        %407 = vxpose.xlu0.b32.cont [14/16] %v199, 128
        %408 = vxpose.xlu0.b32.cont [15/16] %v200, 128
        %409 = vxpose.xlu0.b32.end [16/16] %v201, 128
        %v410 = vpop.trf.xlu0
        %v411 = vpop.trf.xlu0
        %v412 = vpop.trf.xlu0
        %v413 = vpop.trf.xlu0
        %v414 = vpop.trf.xlu0
        %v415 = vpop.trf.xlu0
        %v416 = vpop.trf.xlu0
        %v417 = vpop.trf.xlu0
        %v418 = vpop.trf.xlu0
        %v419 = vpop.trf.xlu0
        %v420 = vpop.trf.xlu0
        %v421 = vpop.trf.xlu0
        %v422 = vpop.trf.xlu0
        %v423 = vpop.trf.xlu0
        %v424 = vpop.trf.xlu0
        %v425 = vpop.trf.xlu0
        %426 = vxpose.xlu0.b32.start [1/16] %v202, 128
        %427 = vxpose.xlu0.b32.cont [2/16] %v203, 128
        %428 = vxpose.xlu0.b32.cont [3/16] %v204, 128
        %429 = vxpose.xlu0.b32.cont [4/16] %v205, 128
        %430 = vxpose.xlu0.b32.cont [5/16] %v206, 128
        %431 = vxpose.xlu0.b32.cont [6/16] %v207, 128
        %432 = vxpose.xlu0.b32.cont [7/16] %v208, 128
        %433 = vxpose.xlu0.b32.cont [8/16] %v209, 128
        %434 = vxpose.xlu0.b32.cont [9/16] %v210, 128
        %435 = vxpose.xlu0.b32.cont [10/16] %v211, 128
        %436 = vxpose.xlu0.b32.cont [11/16] %v212, 128
        %437 = vxpose.xlu0.b32.cont [12/16] %v213, 128
        %438 = vxpose.xlu0.b32.cont [13/16] %v214, 128
        %439 = vxpose.xlu0.b32.cont [14/16] %v215, 128
        %440 = vxpose.xlu0.b32.cont [15/16] %v216, 128
        %441 = vxpose.xlu0.b32.end [16/16] %v217, 128
        %v442 = vpop.trf.xlu0
        %v443 = vpop.trf.xlu0
        %v444 = vpop.trf.xlu0
        %v445 = vpop.trf.xlu0
        %v446 = vpop.trf.xlu0
        %v447 = vpop.trf.xlu0
        %v448 = vpop.trf.xlu0
        %v449 = vpop.trf.xlu0
        %v450 = vpop.trf.xlu0
        %v451 = vpop.trf.xlu0
        %v452 = vpop.trf.xlu0
        %v453 = vpop.trf.xlu0
        %v454 = vpop.trf.xlu0
        %v455 = vpop.trf.xlu0
        %v456 = vpop.trf.xlu0
        %v457 = vpop.trf.xlu0
        %458 = vxpose.xlu0.b32.start [1/16] %v218, 128
        %459 = vxpose.xlu0.b32.cont [2/16] %v219, 128
        %460 = vxpose.xlu0.b32.cont [3/16] %v220, 128
        %461 = vxpose.xlu0.b32.cont [4/16] %v221, 128
        %462 = vxpose.xlu0.b32.cont [5/16] %v222, 128
        %463 = vxpose.xlu0.b32.cont [6/16] %v223, 128
        %464 = vxpose.xlu0.b32.cont [7/16] %v224, 128
        %465 = vxpose.xlu0.b32.cont [8/16] %v225, 128
        %466 = vxpose.xlu0.b32.cont [9/16] %v226, 128
        %467 = vxpose.xlu0.b32.cont [10/16] %v227, 128
        %468 = vxpose.xlu0.b32.cont [11/16] %v228, 128
        %469 = vxpose.xlu0.b32.cont [12/16] %v229, 128
        %470 = vxpose.xlu0.b32.cont [13/16] %v230, 128
        %471 = vxpose.xlu0.b32.cont [14/16] %v231, 128
        %472 = vxpose.xlu0.b32.cont [15/16] %v232, 128
        %473 = vxpose.xlu0.b32.end [16/16] %v233, 128
        %v474 = vpop.trf.xlu0
        %v475 = vpop.trf.xlu0
        %v476 = vpop.trf.xlu0
        %v477 = vpop.trf.xlu0
        %v478 = vpop.trf.xlu0
        %v479 = vpop.trf.xlu0
        %v480 = vpop.trf.xlu0
        %v481 = vpop.trf.xlu0
        %v482 = vpop.trf.xlu0
        %v483 = vpop.trf.xlu0
        %v484 = vpop.trf.xlu0
        %v485 = vpop.trf.xlu0
        %v486 = vpop.trf.xlu0
        %v487 = vpop.trf.xlu0
        %v488 = vpop.trf.xlu0
        %v489 = vpop.trf.xlu0
        %490 = vxpose.xlu0.b32.start [1/16] %v234, 128
        %491 = vxpose.xlu0.b32.cont [2/16] %v235, 128
        %492 = vxpose.xlu0.b32.cont [3/16] %v236, 128
        %493 = vxpose.xlu0.b32.cont [4/16] %v237, 128
        %494 = vxpose.xlu0.b32.cont [5/16] %v238, 128
        %495 = vxpose.xlu0.b32.cont [6/16] %v239, 128
        %496 = vxpose.xlu0.b32.cont [7/16] %v240, 128
        %497 = vxpose.xlu0.b32.cont [8/16] %v241, 128
        %498 = vxpose.xlu0.b32.cont [9/16] %v242, 128
        %499 = vxpose.xlu0.b32.cont [10/16] %v243, 128
        %500 = vxpose.xlu0.b32.cont [11/16] %v244, 128
        %501 = vxpose.xlu0.b32.cont [12/16] %v245, 128
        %502 = vxpose.xlu0.b32.cont [13/16] %v246, 128
        %503 = vxpose.xlu0.b32.cont [14/16] %v247, 128
        %504 = vxpose.xlu0.b32.cont [15/16] %v248, 128
        %505 = vxpose.xlu0.b32.end [16/16] %v249, 128
        %v506 = vpop.trf.xlu0
        %v507 = vpop.trf.xlu0
        %v508 = vpop.trf.xlu0
        %v509 = vpop.trf.xlu0
        %v510 = vpop.trf.xlu0
        %v511 = vpop.trf.xlu0
        %v512 = vpop.trf.xlu0
        %v513 = vpop.trf.xlu0
        %v514 = vpop.trf.xlu0
        %v515 = vpop.trf.xlu0
        %v516 = vpop.trf.xlu0
        %v517 = vpop.trf.xlu0
        %v518 = vpop.trf.xlu0
        %v519 = vpop.trf.xlu0
        %v520 = vpop.trf.xlu0
        %v521 = vpop.trf.xlu0
        %522 = vxpose.xlu0.b32.start [1/16] %v250, 128
        %523 = vxpose.xlu0.b32.cont [2/16] %v251, 128
        %524 = vxpose.xlu0.b32.cont [3/16] %v252, 128
        %525 = vxpose.xlu0.b32.cont [4/16] %v253, 128
        %526 = vxpose.xlu0.b32.cont [5/16] %v254, 128
        %527 = vxpose.xlu0.b32.cont [6/16] %v255, 128
        %528 = vxpose.xlu0.b32.cont [7/16] %v256, 128
        %529 = vxpose.xlu0.b32.cont [8/16] %v257, 128
        %530 = vxpose.xlu0.b32.cont [9/16] %v258, 128
        %531 = vxpose.xlu0.b32.cont [10/16] %v259, 128
        %532 = vxpose.xlu0.b32.cont [11/16] %v260, 128
        %533 = vxpose.xlu0.b32.cont [12/16] %v261, 128
        %534 = vxpose.xlu0.b32.cont [13/16] %v262, 128
        %535 = vxpose.xlu0.b32.cont [14/16] %v263, 128
        %536 = vxpose.xlu0.b32.cont [15/16] %v264, 128
        %537 = vxpose.xlu0.b32.end [16/16] %v265, 128
        %v538 = vpop.trf.xlu0
        %v539 = vpop.trf.xlu0
        %v540 = vpop.trf.xlu0
        %v541 = vpop.trf.xlu0
        %v542 = vpop.trf.xlu0
        %v543 = vpop.trf.xlu0
        %v544 = vpop.trf.xlu0
        %v545 = vpop.trf.xlu0
        %v546 = vpop.trf.xlu0
        %v547 = vpop.trf.xlu0
        %v548 = vpop.trf.xlu0
        %v549 = vpop.trf.xlu0
        %v550 = vpop.trf.xlu0
        %v551 = vpop.trf.xlu0
        %v552 = vpop.trf.xlu0
        %v553 = vpop.trf.xlu0
        %554 = vxpose.xlu0.b32.start [1/16] %v266, 128
        %555 = vxpose.xlu0.b32.cont [2/16] %v267, 128
        %556 = vxpose.xlu0.b32.cont [3/16] %v268, 128
        %557 = vxpose.xlu0.b32.cont [4/16] %v269, 128
        %558 = vxpose.xlu0.b32.cont [5/16] %v270, 128
        %559 = vxpose.xlu0.b32.cont [6/16] %v271, 128
        %560 = vxpose.xlu0.b32.cont [7/16] %v272, 128
        %561 = vxpose.xlu0.b32.cont [8/16] %v273, 128
        %562 = vxpose.xlu0.b32.cont [9/16] %v274, 128
        %563 = vxpose.xlu0.b32.cont [10/16] %v275, 128
        %564 = vxpose.xlu0.b32.cont [11/16] %v276, 128
        %565 = vxpose.xlu0.b32.cont [12/16] %v277, 128
        %566 = vxpose.xlu0.b32.cont [13/16] %v278, 128
        %567 = vxpose.xlu0.b32.cont [14/16] %v279, 128
        %568 = vxpose.xlu0.b32.cont [15/16] %v280, 128
        %569 = vxpose.xlu0.b32.end [16/16] %v281, 128
        %v570 = vpop.trf.xlu0
        %v571 = vpop.trf.xlu0
        %v572 = vpop.trf.xlu0
        %v573 = vpop.trf.xlu0
        %v574 = vpop.trf.xlu0
        %v575 = vpop.trf.xlu0
        %v576 = vpop.trf.xlu0
        %v577 = vpop.trf.xlu0
        %v578 = vpop.trf.xlu0
        %v579 = vpop.trf.xlu0
        %v580 = vpop.trf.xlu0
        %v581 = vpop.trf.xlu0
        %v582 = vpop.trf.xlu0
        %v583 = vpop.trf.xlu0
        %v584 = vpop.trf.xlu0
        %v585 = vpop.trf.xlu0
        %586 = vxpose.xlu0.b32.start [1/16] %v282, 128
        %587 = vxpose.xlu0.b32.cont [2/16] %v283, 128
        %588 = vxpose.xlu0.b32.cont [3/16] %v284, 128
        %589 = vxpose.xlu0.b32.cont [4/16] %v285, 128
        %590 = vxpose.xlu0.b32.cont [5/16] %v286, 128
        %591 = vxpose.xlu0.b32.cont [6/16] %v287, 128
        %592 = vxpose.xlu0.b32.cont [7/16] %v288, 128
        %593 = vxpose.xlu0.b32.cont [8/16] %v289, 128
        %594 = vxpose.xlu0.b32.cont [9/16] %v290, 128
        %595 = vxpose.xlu0.b32.cont [10/16] %v291, 128
        %596 = vxpose.xlu0.b32.cont [11/16] %v292, 128
        %597 = vxpose.xlu0.b32.cont [12/16] %v293, 128
        %598 = vxpose.xlu0.b32.cont [13/16] %v294, 128
        %599 = vxpose.xlu0.b32.cont [14/16] %v295, 128
        %600 = vxpose.xlu0.b32.cont [15/16] %v296, 128
        %601 = vxpose.xlu0.b32.end [16/16] %v297, 128
        %v602 = vpop.trf.xlu0
        %v603 = vpop.trf.xlu0
        %v604 = vpop.trf.xlu0
        %v605 = vpop.trf.xlu0
        %v606 = vpop.trf.xlu0
        %v607 = vpop.trf.xlu0
        %v608 = vpop.trf.xlu0
        %v609 = vpop.trf.xlu0
        %v610 = vpop.trf.xlu0
        %v611 = vpop.trf.xlu0
        %v612 = vpop.trf.xlu0
        %v613 = vpop.trf.xlu0
        %v614 = vpop.trf.xlu0
        %v615 = vpop.trf.xlu0
        %v616 = vpop.trf.xlu0
        %v617 = vpop.trf.xlu0
        %618 = vxpose.xlu0.b32.start [1/16] %v298, 128
        %619 = vxpose.xlu0.b32.cont [2/16] %v299, 128
        %620 = vxpose.xlu0.b32.cont [3/16] %v300, 128
        %621 = vxpose.xlu0.b32.cont [4/16] %v301, 128
        %622 = vxpose.xlu0.b32.cont [5/16] %v302, 128
        %623 = vxpose.xlu0.b32.cont [6/16] %v303, 128
        %624 = vxpose.xlu0.b32.cont [7/16] %v304, 128
        %625 = vxpose.xlu0.b32.cont [8/16] %v305, 128
        %626 = vxpose.xlu0.b32.cont [9/16] %v306, 128
        %627 = vxpose.xlu0.b32.cont [10/16] %v307, 128
        %628 = vxpose.xlu0.b32.cont [11/16] %v308, 128
        %629 = vxpose.xlu0.b32.cont [12/16] %v309, 128
        %630 = vxpose.xlu0.b32.cont [13/16] %v310, 128
        %631 = vxpose.xlu0.b32.cont [14/16] %v311, 128
        %632 = vxpose.xlu0.b32.cont [15/16] %v312, 128
        %633 = vxpose.xlu0.b32.end [16/16] %v313, 128
        %v634 = vpop.trf.xlu0
        %v635 = vpop.trf.xlu0
        %v636 = vpop.trf.xlu0
        %v637 = vpop.trf.xlu0
        %v638 = vpop.trf.xlu0
        %v639 = vpop.trf.xlu0
        %v640 = vpop.trf.xlu0
        %v641 = vpop.trf.xlu0
        %v642 = vpop.trf.xlu0
        %v643 = vpop.trf.xlu0
        %v644 = vpop.trf.xlu0
        %v645 = vpop.trf.xlu0
        %v646 = vpop.trf.xlu0
        %v647 = vpop.trf.xlu0
        %v648 = vpop.trf.xlu0
        %v649 = vpop.trf.xlu0
        %650 = vxpose.xlu0.b32.start [1/16] %v314, 128
        %651 = vxpose.xlu0.b32.cont [2/16] %v315, 128
        %652 = vxpose.xlu0.b32.cont [3/16] %v316, 128
        %653 = vxpose.xlu0.b32.cont [4/16] %v317, 128
        %654 = vxpose.xlu0.b32.cont [5/16] %v318, 128
        %655 = vxpose.xlu0.b32.cont [6/16] %v319, 128
        %656 = vxpose.xlu0.b32.cont [7/16] %v320, 128
        %657 = vxpose.xlu0.b32.cont [8/16] %v321, 128
        %658 = vxpose.xlu0.b32.cont [9/16] %v322, 128
        %659 = vxpose.xlu0.b32.cont [10/16] %v323, 128
        %660 = vxpose.xlu0.b32.cont [11/16] %v324, 128
        %661 = vxpose.xlu0.b32.cont [12/16] %v325, 128
        %662 = vxpose.xlu0.b32.cont [13/16] %v326, 128
        %663 = vxpose.xlu0.b32.cont [14/16] %v327, 128
        %664 = vxpose.xlu0.b32.cont [15/16] %v328, 128
        %665 = vxpose.xlu0.b32.end [16/16] %v329, 128
        %v666 = vpop.trf.xlu0
        %v667 = vpop.trf.xlu0
        %v668 = vpop.trf.xlu0
        %v669 = vpop.trf.xlu0
        %v670 = vpop.trf.xlu0
        %v671 = vpop.trf.xlu0
        %v672 = vpop.trf.xlu0
        %v673 = vpop.trf.xlu0
        %v674 = vpop.trf.xlu0
        %v675 = vpop.trf.xlu0
        %v676 = vpop.trf.xlu0
        %v677 = vpop.trf.xlu0
        %v678 = vpop.trf.xlu0
        %v679 = vpop.trf.xlu0
        %v680 = vpop.trf.xlu0
        %v681 = vpop.trf.xlu0
        %682 = vxpose.xlu0.b32.start [1/16] %v330, 128
        %683 = vxpose.xlu0.b32.cont [2/16] %v331, 128
        %684 = vxpose.xlu0.b32.cont [3/16] %v332, 128
        %685 = vxpose.xlu0.b32.cont [4/16] %v333, 128
        %686 = vxpose.xlu0.b32.cont [5/16] %v334, 128
        %687 = vxpose.xlu0.b32.cont [6/16] %v335, 128
        %688 = vxpose.xlu0.b32.cont [7/16] %v336, 128
        %689 = vxpose.xlu0.b32.cont [8/16] %v337, 128
        %690 = vxpose.xlu0.b32.cont [9/16] %v338, 128
        %691 = vxpose.xlu0.b32.cont [10/16] %v339, 128
        %692 = vxpose.xlu0.b32.cont [11/16] %v340, 128
        %693 = vxpose.xlu0.b32.cont [12/16] %v341, 128
        %694 = vxpose.xlu0.b32.cont [13/16] %v342, 128
        %695 = vxpose.xlu0.b32.cont [14/16] %v343, 128
        %696 = vxpose.xlu0.b32.cont [15/16] %v344, 128
        %697 = vxpose.xlu0.b32.end [16/16] %v345, 128
        %v698 = vpop.trf.xlu0
        %v699 = vpop.trf.xlu0
        %v700 = vpop.trf.xlu0
        %v701 = vpop.trf.xlu0
        %v702 = vpop.trf.xlu0
        %v703 = vpop.trf.xlu0
        %v704 = vpop.trf.xlu0
        %v705 = vpop.trf.xlu0
        %v706 = vpop.trf.xlu0
        %v707 = vpop.trf.xlu0
        %v708 = vpop.trf.xlu0
        %v709 = vpop.trf.xlu0
        %v710 = vpop.trf.xlu0
        %v711 = vpop.trf.xlu0
        %v712 = vpop.trf.xlu0
        %v713 = vpop.trf.xlu0
        %714 = vxpose.xlu0.b32.start [1/16] %v346, 128
        %715 = vxpose.xlu0.b32.cont [2/16] %v347, 128
        %716 = vxpose.xlu0.b32.cont [3/16] %v348, 128
        %717 = vxpose.xlu0.b32.cont [4/16] %v349, 128
        %718 = vxpose.xlu0.b32.cont [5/16] %v350, 128
        %719 = vxpose.xlu0.b32.cont [6/16] %v351, 128
        %720 = vxpose.xlu0.b32.cont [7/16] %v352, 128
        %721 = vxpose.xlu0.b32.cont [8/16] %v353, 128
        %722 = vxpose.xlu0.b32.cont [9/16] %v354, 128
        %723 = vxpose.xlu0.b32.cont [10/16] %v355, 128
        %724 = vxpose.xlu0.b32.cont [11/16] %v356, 128
        %725 = vxpose.xlu0.b32.cont [12/16] %v357, 128
        %726 = vxpose.xlu0.b32.cont [13/16] %v358, 128
        %727 = vxpose.xlu0.b32.cont [14/16] %v359, 128
        %728 = vxpose.xlu0.b32.cont [15/16] %v360, 128
        %729 = vxpose.xlu0.b32.end [16/16] %v361, 128
        %v730 = vpop.trf.xlu0
        %v731 = vpop.trf.xlu0
        %v732 = vpop.trf.xlu0
        %v733 = vpop.trf.xlu0
        %v734 = vpop.trf.xlu0
        %v735 = vpop.trf.xlu0
        %v736 = vpop.trf.xlu0
        %v737 = vpop.trf.xlu0
        %v738 = vpop.trf.xlu0
        %v739 = vpop.trf.xlu0
        %v740 = vpop.trf.xlu0
        %v741 = vpop.trf.xlu0
        %v742 = vpop.trf.xlu0
        %v743 = vpop.trf.xlu0
        %v744 = vpop.trf.xlu0
        %v745 = vpop.trf.xlu0
        %746 = vst [vmem:[%s146] sm:$0xff] %v378
        %747 = vst [vmem:[%s146 + $0x8] sm:$0xff] %v410
        %748 = vst [vmem:[%s146 + $0x10] sm:$0xff] %v442
        %749 = vst [vmem:[%s146 + $0x18] sm:$0xff] %v474
        %750 = vst [vmem:[%s146 + $0x20] sm:$0xff] %v506
        %751 = vst [vmem:[%s146 + $0x28] sm:$0xff] %v538
        %752 = vst [vmem:[%s146 + $0x30] sm:$0xff] %v570
        %753 = vst [vmem:[%s146 + $0x38] sm:$0xff] %v602
        %754 = vst [vmem:[%s146 + $0x40] sm:$0xff] %v634
        %755 = vst [vmem:[%s146 + $0x48] sm:$0xff] %v666
        %756 = vst [vmem:[%s146 + $0x50] sm:$0xff] %v698
        %757 = vst [vmem:[%s146 + $0x58] sm:$0xff] %v730
        %758 = vst [vmem:[%s146 + $0x60] sm:$0xff] %v379
        %759 = vst [vmem:[%s146 + $0x68] sm:$0xff] %v411
        %760 = vst [vmem:[%s146 + $0x70] sm:$0xff] %v443
        %761 = vst [vmem:[%s146 + $0x78] sm:$0xff] %v475
        %762 = vst [vmem:[%s146 + $0x80] sm:$0xff] %v507
        %763 = vst [vmem:[%s146 + $0x88] sm:$0xff] %v539
        %764 = vst [vmem:[%s146 + $0x90] sm:$0xff] %v571
        %765 = vst [vmem:[%s146 + $0x98] sm:$0xff] %v603
        %766 = vst [vmem:[%s146 + $0xa0] sm:$0xff] %v635
        %767 = vst [vmem:[%s146 + $0xa8] sm:$0xff] %v667
        %768 = vst [vmem:[%s146 + $0xb0] sm:$0xff] %v699
        %769 = vst [vmem:[%s146 + $0xb8] sm:$0xff] %v731
        %770 = vst [vmem:[%s146 + $0xc0] sm:$0xff] %v380
        %771 = vst [vmem:[%s146 + $0xc8] sm:$0xff] %v412
        %772 = vst [vmem:[%s146 + $0xd0] sm:$0xff] %v444
        %773 = vst [vmem:[%s146 + $0xd8] sm:$0xff] %v476
        %774 = vst [vmem:[%s146 + $0xe0] sm:$0xff] %v508
        %775 = vst [vmem:[%s146 + $0xe8] sm:$0xff] %v540
        %776 = vst [vmem:[%s146 + $0xf0] sm:$0xff] %v572
        %777 = vst [vmem:[%s146 + $0xf8] sm:$0xff] %v604
        %778 = vst [vmem:[%s146 + $0x100] sm:$0xff] %v636
        %779 = vst [vmem:[%s146 + $0x108] sm:$0xff] %v668
        %780 = vst [vmem:[%s146 + $0x110] sm:$0xff] %v700
        %781 = vst [vmem:[%s146 + $0x118] sm:$0xff] %v732
        %782 = vst [vmem:[%s146 + $0x120] sm:$0xff] %v381
        %783 = vst [vmem:[%s146 + $0x128] sm:$0xff] %v413
        %784 = vst [vmem:[%s146 + $0x130] sm:$0xff] %v445
        %785 = vst [vmem:[%s146 + $0x138] sm:$0xff] %v477
        %786 = vst [vmem:[%s146 + $0x140] sm:$0xff] %v509
        %787 = vst [vmem:[%s146 + $0x148] sm:$0xff] %v541
        %788 = vst [vmem:[%s146 + $0x150] sm:$0xff] %v573
        %789 = vst [vmem:[%s146 + $0x158] sm:$0xff] %v605
        %790 = vst [vmem:[%s146 + $0x160] sm:$0xff] %v637
        %791 = vst [vmem:[%s146 + $0x168] sm:$0xff] %v669
        %792 = vst [vmem:[%s146 + $0x170] sm:$0xff] %v701
        %793 = vst [vmem:[%s146 + $0x178] sm:$0xff] %v733
        %794 = vst [vmem:[%s146 + $0x180] sm:$0xff] %v382
        %795 = vst [vmem:[%s146 + $0x188] sm:$0xff] %v414
        %796 = vst [vmem:[%s146 + $0x190] sm:$0xff] %v446
        %797 = vst [vmem:[%s146 + $0x198] sm:$0xff] %v478
        %798 = vst [vmem:[%s146 + $0x1a0] sm:$0xff] %v510
        %799 = vst [vmem:[%s146 + $0x1a8] sm:$0xff] %v542
        %800 = vst [vmem:[%s146 + $0x1b0] sm:$0xff] %v574
        %801 = vst [vmem:[%s146 + $0x1b8] sm:$0xff] %v606
        %802 = vst [vmem:[%s146 + $0x1c0] sm:$0xff] %v638
        %803 = vst [vmem:[%s146 + $0x1c8] sm:$0xff] %v670
        %804 = vst [vmem:[%s146 + $0x1d0] sm:$0xff] %v702
        %805 = vst [vmem:[%s146 + $0x1d8] sm:$0xff] %v734
        %s806 = sand.u32 %s65, 1
        %s807 = scalar_lea.sflag [#allocation3], %s806
        %s808 = sand.u32 %s65, 1
        %s809 = smul.addr %s808, 480
        %s810 = scalar_lea.vmem [#allocation2], %s809
        // Predicated region
        $region25: #{tpu_custom_call.1} parent=23 // pred_check
          %p811 = pneg %p75
        $region26: #{tpu_custom_call.1} parent=23 // pred_check_branch
          %813 = sbr.rel (%p811) target = $region28
        $region27: #{tpu_custom_call.1} parent=23 // pred_region
          %s814 = smul.u32 12, %s20
          %s815 = ssub.s32 25, %s814
          %p816 = scmp.lt.s32.totalorder %s815, 12
          %s817 = scalar_select %p816, %s815, 12
          %s818 = smul.u32 40, %s817
          %s819 = ssub.s32 480, %s818
          %s820 = sshll.u32 %s819, 4
          %821 = vsyncadd %s807, %s820
          %p822 = scmp.ne.s32.totalorder 0, %s818
          %s823 = smul.addr %s19, 125
          %s824 = sadd.s32 %s814, %s823
          %s825 = smul.addr %s824, 8
          %s826 = scalar_lea.hbm %s1, %s825
          %s827 = smul.u32 %s817, 8
          %s828 = smul.u32 %s827, 5
          %s829 = sshll.u32 %s810, 4
          %s830 = int_to_ptr.vmem [resolvable:$true] %s829
          %s831 = sshll.u32 %s826, 4
          %s832 = int_to_ptr.hbm [resolvable:$true] %s831
          %s833 = sshll.u32 %s828, 4
          %837 = dma.vmem_to_hbm [thread:$0]  (%p822), %s830, %s833, %s832, %s807, 1536, 3200, %s827
        $region28: #{tpu_custom_call.1} parent=23 // pred_fallthru
          _
      $region24: #{tpu_custom_call.1} parent=5 // pred_fallthru
        _
      %p838 = scmp.le.s32.totalorder 2, %s10
      // Predicated region
      $region29: #{tpu_custom_call.1} parent=5 // pred_check
        %p839 = pneg %p838
      $region30: #{tpu_custom_call.1} parent=5 // pred_check_branch
        %841 = sbr.rel (%p839) target = $region32
      $region31: #{tpu_custom_call.1} parent=5 // pred_region
        %s842 = ssub.s32 %s10, 2
        // Predicated region
        $region33: #{tpu_custom_call.1} parent=31 // pred_check
          %p843 = pneg %p81
        $region34: #{tpu_custom_call.1} parent=31 // pred_check_branch
          %845 = sbr.rel (%p843) target = $region36
        $region35: #{tpu_custom_call.1} parent=31 // pred_region
          %s846 = sand.u32 %s66, 1
          %s847 = scalar_lea.sflag [#allocation3], %s846
          %s848 = sand.u32 %s66, 1
          %s849 = smul.addr %s848, 480
          %s850 = scalar_lea.vmem [#allocation2], %s849
          %852 = dma.done %s847, 7680
        $region36: #{tpu_custom_call.1} parent=31 // pred_fallthru
          _
      $region32: #{tpu_custom_call.1} parent=5 // pred_fallthru
        _
    $region6: #{tpu_custom_call.1} parent=1 // loop_footer
      %s14 = sadd.s32 1, %s10
    $region7: #{tpu_custom_call.1} parent=1 // loop_footer_branch
      %9 = sbr.rel target = $region3
    $region8: #{tpu_custom_call.1} parent=1 // loop_exit
      _
    %853 = vsyncpa [#allocation3], 1
    %s854 = scalar_lea.sflag [#allocation3], 1
    %855 = vsyncpa %s854, 1

</llo_original>
